<compile_context>
chip_gen: v6e
topology: v6e:2x2x1
jax: 0.10.0
libtpu: 0.0.40
codegen_flags: <defaults>
</compile_context>

<pallas_src>
import functools

import jax
import jax.numpy as jnp
from jax.experimental import pallas as pl
from jax.experimental.pallas import tpu as pltpu


# ---------------- helpers -----------------------------------------------------

def _round_up(v, m):
    return ((v + m - 1) // m) * m


def _pick_tile(n, candidates):
    for c in candidates:
        if n % c == 0:
            return c
    return 128  # n is always a multiple of 128 here


def _vmem_limit_bytes():
    # Raise the scoped-VMEM limit above the 16/32 MiB defaults but stay under
    # physical capacity (128 MiB v5e/v6e, 64 MiB per-TC on v7x).
    try:
        cap = int(pltpu.get_tpu_info().vmem_capacity_bytes)
        return int(min(0.75 * cap, 100 * 1024 * 1024))
    except Exception:
        return 48 * 1024 * 1024


def _masked_log_softmax(fin, num_classes):
    # log_softmax over the real `num_classes` columns; padded columns masked.
    col = jax.lax.broadcasted_iota(jnp.int32, fin.shape, 1)
    logits = jnp.where(col < num_classes, fin, jnp.float32(-1e30))
    m = jnp.max(logits, axis=1, keepdims=True)
    e = jnp.exp(logits - m)
    s = jnp.sum(e, axis=1, keepdims=True)
    return logits - m - jnp.log(s)


# ---------------- kernels -----------------------------------------------------

def _fused_resident_kernel(x_ref, mat_ref, w1_ref, w2_ref,
                           hid_ref, bef_ref, fin_ref, out_ref, *, num_classes):
    """Small-N path: everything VMEM-resident, bf16 mat read from HBM once."""
    xw1 = jnp.dot(x_ref[...], w1_ref[...],
                  preferred_element_type=jnp.float32)          # f32, tiny K
    mat = mat_ref[...]                                          # bf16

    h = jnp.dot(mat, xw1.astype(jnp.bfloat16),
                preferred_element_type=jnp.float32)
    hid = jnp.maximum(h, 0.0)
    hid_ref[...] = hid

    # dropout(hid): identity at inference.
    # TODO(synk): training-mode dropout (pltpu.prng_seed + stateful_bernoulli)
    # is not part of the eval forward pass.

    bef = jnp.dot(mat, hid.astype(jnp.bfloat16),
                  preferred_element_type=jnp.float32)
    bef_ref[...] = bef

    fin = jnp.dot(bef, w2_ref[...], preferred_element_type=jnp.float32)
    fin_ref[...] = fin
    out_ref[...] = _masked_log_softmax(fin, num_classes)


def _prop_relu_kernel(mat_ref, xw1_ref, hid_ref, acc_ref):
    """hid = relu(mat @ xw1), rows x K tiled, f32 accumulator."""
    k = pl.program_id(1)

    @pl.when(k == 0)
    def _():
        acc_ref[...] = jnp.zeros_like(acc_ref)

    acc_ref[...] += jnp.dot(mat_ref[...], xw1_ref[...],
                            preferred_element_type=jnp.float32)

    @pl.when(k == pl.num_programs(1) - 1)
    def _():
        hid_ref[...] = jnp.maximum(acc_ref[...], 0.0)


def _prop_cls_kernel(mat_ref, hid_ref, w2_ref,
                     bef_ref, fin_ref, out_ref, acc_ref, *, num_classes):
    """bef = mat @ hid; epilogue fuses fin = bef @ w2 and log-softmax."""
    k = pl.program_id(1)

    @pl.when(k == 0)
    def _():
        acc_ref[...] = jnp.zeros_like(acc_ref)

    acc_ref[...] += jnp.dot(mat_ref[...], hid_ref[...].astype(jnp.bfloat16),
                            preferred_element_type=jnp.float32)

    @pl.when(k == pl.num_programs(1) - 1)
    def _():
        bef = acc_ref[...]
        bef_ref[...] = bef
        fin = jnp.dot(bef, w2_ref[...], preferred_element_type=jnp.float32)
        fin_ref[...] = fin
        out_ref[...] = _masked_log_softmax(fin, num_classes)


# ---------------- wrapper -----------------------------------------------------

def matrixgcn_forward(x, mat, w1, w2, *, multilabel=False, force_tiled=False):
    """x:[N,F], mat:[N,N] (normalized adj+I), w1:[F,H], w2:[H,C]."""
    N, F = x.shape
    H = w1.shape[1]
    C = w2.shape[1]

    # Lane-dense zero padding (exactly semantics-preserving).
    Fp = _round_up(max(F, 128), 128)
    Hp = _round_up(max(H, 128), 128)
    Cp = _round_up(max(C, 128), 128)
    w1p = jnp.zeros((Fp, Hp), jnp.float32).at[:F, :H].set(w1.astype(jnp.float32))
    w2p = jnp.zeros((Hp, Cp), jnp.float32).at[:H, :C].set(w2.astype(jnp.float32))

    vmem_limit = _vmem_limit_bytes()

    # Rough resident-footprint estimate (bytes): bf16 mat + f32 tensors + slack.
    resident_bytes = (4 * N * N
                      + 4 * N * Fp + 4 * Fp * Hp + 4 * Hp * Cp
                      + 12 * N * Hp + 8 * N * Cp)
    use_resident = (not force_tiled) and resident_bytes <= vmem_limit // 2

    if use_resident:
        # ---- single fully fused call, mat read from HBM once ----
        x_pad = jnp.zeros((N, Fp), jnp.float32).at[:, :F].set(
            x.astype(jnp.float32))
        vmem = pl.BlockSpec(memory_space=pltpu.MemorySpace.VMEM)
        kernel = functools.partial(_fused_resident_kernel, num_classes=C)

        flops = 2 * N * Fp * Hp + 4 * N * N * Hp + 2 * N * Hp * Cp
        bytes_accessed = (2 * N * N                    # bf16 mat, read once
                          + 4 * (N * Fp + Fp * Hp + Hp * Cp)
                          + 4 * (2 * N * Hp + 2 * N * Cp))

        hid_p, bef_p, fin_p, out_p = pl.pallas_call(
            kernel,
            out_shape=(jax.ShapeDtypeStruct((N, Hp), jnp.float32),
                       jax.ShapeDtypeStruct((N, Hp), jnp.float32),
                       jax.ShapeDtypeStruct((N, Cp), jnp.float32),
                       jax.ShapeDtypeStruct((N, Cp), jnp.float32)),
            in_specs=[vmem, vmem, vmem, vmem],
            out_specs=(vmem, vmem, vmem, vmem),
            compiler_params=pltpu.CompilerParams(
                vmem_limit_bytes=vmem_limit),
            cost_estimate=pl.CostEstimate(flops=flops,
                                          transcendentals=2 * N * Cp,
                                          bytes_accessed=bytes_accessed),
        )(x_pad, mat.astype(jnp.bfloat16), w1p, w2p)
    else:
        # ---- rows x K tiled streaming pipeline (two passes over mat) ----
        Np = _round_up(max(N, 128), 128)
        mat_p = jnp.zeros((Np, Np), jnp.bfloat16).at[:N, :N].set(
            mat.astype(jnp.bfloat16))
        x_p = jnp.zeros((Np, Fp), jnp.float32).at[:N, :F].set(
            x.astype(jnp.float32))

        # Preamble (tiny flops): xw1 = x @ w1 in f32, cast to bf16 once so the
        # streaming k-loop never re-issues this matmul or the cast.
        xw1_bf = jnp.dot(x_p, w1p, preferred_element_type=jnp.float32,
                         precision=jax.lax.Precision.HIGHEST
                         ).astype(jnp.bfloat16)

        tm = _pick_tile(Np, (512, 256, 128))    # row tile
        tk = _pick_tile(Np, (1024, 512, 256, 128))  # reduction tile (bf16)
        gi, gk = Np // tm, Np // tk
        dimsem = ("parallel", "arbitrary")      # rows shard across 2 TCs on v7x

        # Pass 1: hid = relu(mat @ xw1)
        hid_full = pl.pallas_call(
            _prop_relu_kernel,
            out_shape=jax.ShapeDtypeStruct((Np, Hp), jnp.float32),
            grid_spec=pltpu.PrefetchScalarGridSpec(
                num_scalar_prefetch=0,
                grid=(gi, gk),
                in_specs=[pl.BlockSpec((tm, tk), lambda i, k: (i, k)),
                          pl.BlockSpec((tk, Hp), lambda i, k: (k, 0))],
                out_specs=pl.BlockSpec((tm, Hp), lambda i, k: (i, 0)),
                scratch_shapes=[pltpu.VMEM((tm, Hp), jnp.float32)]),
            compiler_params=pltpu.CompilerParams(
                dimension_semantics=dimsem, vmem_limit_bytes=vmem_limit),
            cost_estimate=pl.CostEstimate(
                flops=2 * Np * Np * Hp,
                transcendentals=0,
                bytes_accessed=2 * Np * Np + 2 * Np * Hp + 4 * Np * Hp),
        )(mat_p, xw1_bf)

        # Pass 2: bef = mat @ hid, then (epilogue) fin = bef @ w2, log-softmax.
        kernel2 = functools.partial(_prop_cls_kernel, num_classes=C)
        bef_full, fin_full, out_full = pl.pallas_call(
            kernel2,
            out_shape=(jax.ShapeDtypeStruct((Np, Hp), jnp.float32),
                       jax.ShapeDtypeStruct((Np, Cp), jnp.float32),
                       jax.ShapeDtypeStruct((Np, Cp), jnp.float32)),
            grid_spec=pltpu.PrefetchScalarGridSpec(
                num_scalar_prefetch=0,
                grid=(gi, gk),
                in_specs=[pl.BlockSpec((tm, tk), lambda i, k: (i, k)),
                          pl.BlockSpec((tk, Hp), lambda i, k: (k, 0)),
                          pl.BlockSpec((Hp, Cp), lambda i, k: (0, 0))],
                out_specs=(pl.BlockSpec((tm, Hp), lambda i, k: (i, 0)),
                           pl.BlockSpec((tm, Cp), lambda i, k: (i, 0)),
                           pl.BlockSpec((tm, Cp), lambda i, k: (i, 0))),
                scratch_shapes=[pltpu.VMEM((tm, Hp), jnp.float32)]),
            compiler_params=pltpu.CompilerParams(
                dimension_semantics=dimsem, vmem_limit_bytes=vmem_limit),
            cost_estimate=pl.CostEstimate(
                flops=2 * Np * Np * Hp + 2 * Np * Hp * Cp,
                transcendentals=2 * Np * Cp,
                bytes_accessed=(2 * Np * Np + 4 * Np * Hp + 4 * Hp * Cp
                                + 4 * Np * (Hp + 2 * Cp))),
        )(mat_p, hid_full, w2p)

        hid_p = hid_full[:N]
        bef_p = bef_full[:N]
        fin_p = fin_full[:N]
        out_p = out_full[:N]
        return _slice_outputs(hid_p, bef_p, fin_p, out_p, H, C, multilabel)

    return _slice_outputs(hid_p, bef_p, fin_p, out_p, H, C, multilabel)


def _slice_outputs(hid_p, bef_p, fin_p, out_p, H, C, multilabel):
    hid_x = hid_p[:, :H]
    bef_linear2 = bef_p[:, :H]
    fin_x = fin_p[:, :C]
    out = fin_x if multilabel else out_p[:, :C]
    return (hid_x, bef_linear2, fin_x), out


# ---------------- graph / weight preprocessing (plain JAX glue) ---------------

def build_mat(edge_index, n):
    """normalize(convert_edge2adj(edge_index) + I): dense sym-normalized A+I."""
    adj = jnp.zeros((n, n), jnp.float32)
    adj = adj.at[edge_index[0], edge_index[1]].set(1.0)
    a = adj + jnp.eye(n, dtype=jnp.float32)
    d = jnp.sum(a, axis=1)
    dinv = jnp.where(d > 0, 1.0 / jnp.sqrt(d), 0.0)
    return dinv[:, None] * a * dinv[None, :]


def xavier_uniform(key, shape):
    fan_in, fan_out = shape
    bound = (6.0 / (fan_in + fan_out)) ** 0.5
    return jax.random.uniform(key, shape, jnp.float32, -bound, bound)


def _reference_forward(x, mat, w1, w2):
    """Pure-JAX reference with bf16-quantized propagation operands (matches
    the kernel's numerics) for tolerance checks."""
    bf = lambda a: a.astype(jnp.bfloat16).astype(jnp.float32)
    hi = jax.lax.Precision.HIGHEST
    xw1 = jnp.dot(x, w1, precision=hi)
    hid = jnp.maximum(jnp.dot(bf(mat), bf(xw1)), 0.0)
    bef = jnp.dot(bf(mat), bf(hid))
    fin = jnp.dot(bef, w2, precision=hi)
    out = jax.nn.log_softmax(fin, axis=1)
    return (hid, bef, fin), out


# ---------------- main --------------------------------------------------------

if __name__ == "__main__":
    base_key = jax.random.PRNGKey(0)

    def run_case(n_nodes, num_features, hid_dim, num_classes, force_tiled):
        kx, kw1, kw2 = jax.random.split(jax.random.fold_in(base_key, n_nodes), 3)
        x = jax.random.normal(kx, (n_nodes, num_features), jnp.float32)

        # deterministic undirected graph: ring + chords (both directions)
        src = jnp.arange(n_nodes)
        dst = (src + 1) % n_nodes
        chord_s = jnp.arange(0, n_nodes, 4)
        chord_d = (chord_s + n_nodes // 2) % n_nodes
        edge_index = jnp.stack([
            jnp.concatenate([src, dst, chord_s, chord_d]),
            jnp.concatenate([dst, src, chord_d, chord_s]),
        ])
        mat = build_mat(edge_index, n_nodes)
        w1 = xavier_uniform(kw1, (num_features, hid_dim))
        w2 = xavier_uniform(kw2, (hid_dim, num_classes))

        (hid_x, bef_l2, fin_x), out = matrixgcn_forward(
            x, mat, w1, w2, multilabel=False, force_tiled=force_tiled)
        jax.block_until_ready((hid_x, bef_l2, fin_x, out))

        assert hid_x.shape == (n_nodes, hid_dim)
        assert bef_l2.shape == (n_nodes, hid_dim)
        assert fin_x.shape == (n_nodes, num_classes)
        assert out.shape == (n_nodes, num_classes)
        # log_softmax rows should exponentiate-sum to ~1
        assert bool(jnp.all(jnp.abs(jnp.sum(jnp.exp(out), axis=1) - 1.0) < 1e-3))

        (rh, rb, rf), ro = _reference_forward(x, mat, w1, w2)
        for got, want in ((hid_x, rh), (bef_l2, rb), (fin_x, rf), (out, ro)):
            assert bool(jnp.allclose(got, want, rtol=3e-2, atol=3e-2))

    # Small graph -> fully fused VMEM-resident kernel (mat read from HBM once).
    run_case(16, 8, 32, 4, force_tiled=False)
    # Larger graph -> rows x K tiled, double-buffered streaming path.
    run_case(384, 8, 32, 4, force_tiled=True)

    print("KERNEL_OK")
</pallas_src>

<mosaic_0001>
module attributes {stable_mosaic.version = 11 : i64} {
  func.func @_fused_resident_kernel(%arg0: memref<16x128xf32, #tpu.memory_space<vmem>>, %arg1: memref<16x16xbf16, #tpu.memory_space<vmem>>, %arg2: memref<128x128xf32, #tpu.memory_space<vmem>>, %arg3: memref<128x128xf32, #tpu.memory_space<vmem>>, %arg4: memref<16x128xf32, #tpu.memory_space<vmem>>, %arg5: memref<16x128xf32, #tpu.memory_space<vmem>>, %arg6: memref<16x128xf32, #tpu.memory_space<vmem>>, %arg7: memref<16x128xf32, #tpu.memory_space<vmem>>) attributes {dimension_semantics = [], scalar_prefetch = 0 : i64, scratch_operands = 0 : i64, tpu.core_type = #tpu.core_type<tc>} {
    %c0 = arith.constant 0 : index
    %c0_0 = arith.constant 0 : index
    %0 = vector.load %arg0[%c0, %c0_0] : memref<16x128xf32, #tpu.memory_space<vmem>>, vector<16x128xf32>
    %c0_1 = arith.constant 0 : index
    %c0_2 = arith.constant 0 : index
    %1 = vector.load %arg2[%c0_1, %c0_2] : memref<128x128xf32, #tpu.memory_space<vmem>>, vector<128x128xf32>
    %cst = arith.constant dense<0.000000e+00> : vector<16x128xf32>
    %2 = tpu.matmul %0, %1, %cst {dimension_numbers = #tpu.dot_dimension_numbers<[1], [0], [0], [1], [0, 0, 1, 1], [], []>} : vector<16x128xf32>, vector<128x128xf32>, vector<16x128xf32> -> vector<16x128xf32>
    %c0_3 = arith.constant 0 : index
    %c0_4 = arith.constant 0 : index
    %3 = vector.load %arg1[%c0_3, %c0_4] : memref<16x16xbf16, #tpu.memory_space<vmem>>, vector<16x16xbf16>
    %4 = arith.truncf %2 : vector<16x128xf32> to vector<16x128xbf16>
    %cst_5 = arith.constant dense<0.000000e+00> : vector<16x128xf32>
    %5 = tpu.matmul %3, %4, %cst_5 {dimension_numbers = #tpu.dot_dimension_numbers<[1], [0], [0], [1], [0, 0, 1, 1], [], []>} : vector<16x16xbf16>, vector<16x128xbf16>, vector<16x128xf32> -> vector<16x128xf32>
    %cst_6 = arith.constant 0.000000e+00 : f32
    %6 = vector.broadcast %cst_6 : f32 to vector<16x128xf32>
    %7 = arith.maximumf %5, %6 : vector<16x128xf32>
    %c0_7 = arith.constant 0 : index
    %c0_8 = arith.constant 0 : index
    %8 = vector.load %arg4[%c0_7, %c0_8] : memref<16x128xf32, #tpu.memory_space<vmem>>, vector<16x128xf32>
    tpu.vector_store %arg4[%c0_7, %c0_8], %7 {strides = array<i32>} : memref<16x128xf32, #tpu.memory_space<vmem>>, vector<16x128xf32>,
    %9 = arith.truncf %7 : vector<16x128xf32> to vector<16x128xbf16>
    %cst_9 = arith.constant dense<0.000000e+00> : vector<16x128xf32>
    %10 = tpu.matmul %3, %9, %cst_9 {dimension_numbers = #tpu.dot_dimension_numbers<[1], [0], [0], [1], [0, 0, 1, 1], [], []>} : vector<16x16xbf16>, vector<16x128xbf16>, vector<16x128xf32> -> vector<16x128xf32>
    %c0_10 = arith.constant 0 : index
    %c0_11 = arith.constant 0 : index
    %11 = vector.load %arg5[%c0_10, %c0_11] : memref<16x128xf32, #tpu.memory_space<vmem>>, vector<16x128xf32>
    tpu.vector_store %arg5[%c0_10, %c0_11], %10 {strides = array<i32>} : memref<16x128xf32, #tpu.memory_space<vmem>>, vector<16x128xf32>,
    %c0_12 = arith.constant 0 : index
    %c0_13 = arith.constant 0 : index
    %12 = vector.load %arg3[%c0_12, %c0_13] : memref<128x128xf32, #tpu.memory_space<vmem>>, vector<128x128xf32>
    %cst_14 = arith.constant dense<0.000000e+00> : vector<16x128xf32>
    %13 = tpu.matmul %10, %12, %cst_14 {dimension_numbers = #tpu.dot_dimension_numbers<[1], [0], [0], [1], [0, 0, 1, 1], [], []>} : vector<16x128xf32>, vector<128x128xf32>, vector<16x128xf32> -> vector<16x128xf32>
    %c0_15 = arith.constant 0 : index
    %c0_16 = arith.constant 0 : index
    %14 = vector.load %arg6[%c0_15, %c0_16] : memref<16x128xf32, #tpu.memory_space<vmem>>, vector<16x128xf32>
    tpu.vector_store %arg6[%c0_15, %c0_16], %13 {strides = array<i32>} : memref<16x128xf32, #tpu.memory_space<vmem>>, vector<16x128xf32>,
    %15 = tpu.iota {dimensions = array<i32: 1>} : vector<16x128xi32>
    %c4_i32 = arith.constant 4 : i32
    %16 = vector.broadcast %c4_i32 : i32 to vector<16x128xi32>
    %17 = arith.cmpi slt, %15, %16 : vector<16x128xi32>
    %cst_17 = arith.constant -1.000000e+30 : f32
    %18 = vector.broadcast %cst_17 : f32 to vector<16x128xf32>
    %19 = arith.select %17, %13, %18 : vector<16x128xi1>, vector<16x128xf32>
    %cst_18 = arith.constant dense<0xFF800000> : vector<16xf32>
    %20 = vector.multi_reduction <maximumf>, %19, %cst_18 [1] : vector<16x128xf32> to vector<16xf32>
    %21 = vector.shape_cast %20 : vector<16xf32> to vector<16x1xf32>
    %22 = vector.broadcast %21 : vector<16x1xf32> to vector<16x128xf32>
    %23 = arith.subf %19, %22 : vector<16x128xf32>
    %24 = math.exp %23 : vector<16x128xf32>
    %cst_19 = arith.constant dense<0.000000e+00> : vector<16xf32>
    %25 = vector.multi_reduction <add>, %24, %cst_19 [1] : vector<16x128xf32> to vector<16xf32>
    %26 = vector.shape_cast %25 : vector<16xf32> to vector<16x1xf32>
    %27 = vector.broadcast %21 : vector<16x1xf32> to vector<16x128xf32>
    %28 = arith.subf %19, %27 : vector<16x128xf32>
    %29 = math.log %26 : vector<16x1xf32>
    %30 = vector.broadcast %29 : vector<16x1xf32> to vector<16x128xf32>
    %31 = arith.subf %28, %30 : vector<16x128xf32>
    %c0_20 = arith.constant 0 : index
    %c0_21 = arith.constant 0 : index
    %32 = vector.load %arg7[%c0_20, %c0_21] : memref<16x128xf32, #tpu.memory_space<vmem>>, vector<16x128xf32>
    tpu.vector_store %arg7[%c0_20, %c0_21], %31 {strides = array<i32>} : memref<16x128xf32, #tpu.memory_space<vmem>>, vector<16x128xf32>,
    return
  }
}

</mosaic_0001>

<llo_original>
// kernel: tpu_custom_call.1
$region0: #{tpu_custom_call.1}
  #allocation0 [shape = 'u32[]', space=smem, size = 0x4, offset = 0x4, fixed_abs, tag = 'smem constant byte address 0x4 - core index']
  #allocation1 [shape = 'u32[144,128]{1,0:T(1,128)}', space=vmem, size = 0x12000, scoped, tag = 'internal scratch']
  %s0 = inlined_call_operand.hbm [shape: f32[16,128], index: 0, kind: input, shape index: {}]
  %s1 = inlined_call_operand.hbm [shape: bf16[16,16], index: 1, kind: input, shape index: {}]
  %s2 = inlined_call_operand.hbm [shape: f32[128,128], index: 2, kind: input, shape index: {}]
  %s3 = inlined_call_operand.hbm [shape: f32[128,128], index: 3, kind: input, shape index: {}]
  %s4 = inlined_call_operand.hbm [shape: f32[16,128], index: 4, kind: output, shape index: {0}]
  %s5 = inlined_call_operand.hbm [shape: f32[16,128], index: 5, kind: output, shape index: {1}]
  %s6 = inlined_call_operand.hbm [shape: f32[16,128], index: 6, kind: output, shape index: {2}]
  %s7 = inlined_call_operand.hbm [shape: f32[16,128], index: 7, kind: output, shape index: {3}]
  %8 = xla_tuple %s4, %s5, %s6, %s7
  %s9 = sld [smem:[#allocation0]]
  $region66: #{tpu_custom_call.1} parent=0
    _
  %s11 = ssub.s32 1, %s9
  %s12 = scalar_select 0, %s11, %s9
  $region1: #{tpu_custom_call.1} parent=0
    #allocation2 [shape = 'u8[8192]{0}', space=vmem, size = 0x2000, scoped, tag = 'input window, operand 0, single buffered']
    #allocation3 [shape = 's32[1]{0}', space=sflag, size = 0x4, scoped, tag = 'scoped memory for tpu_custom_call.1']
    #allocation4 [shape = 's32[1]{0}', space=sflag, size = 0x4, scoped, tag = 'scoped memory for tpu_custom_call.1']
    #allocation5 [shape = 'u8[4096]{0}', space=vmem, size = 0x1000, scoped, tag = 'input window, operand 1, single buffered']
    #allocation6 [shape = 's32[1]{0}', space=sflag, size = 0x4, scoped, tag = 'scoped memory for tpu_custom_call.1']
    #allocation7 [shape = 'u8[65536]{0}', space=vmem, size = 0x10000, scoped, tag = 'input window, operand 2, single buffered']
    #allocation8 [shape = 'u8[65536]{0}', space=vmem, size = 0x10000, scoped, tag = 'input window, operand 3, single buffered']
    #allocation9 [shape = 's32[1]{0}', space=sflag, size = 0x4, scoped, tag = 'scoped memory for tpu_custom_call.1']
    #allocation10 [shape = 'u8[8192]{0}', space=vmem, size = 0x2000, scoped, tag = 'output window, operand 0, single buffered']
    #allocation11 [shape = 'u8[8192]{0}', space=vmem, size = 0x2000, scoped, tag = 'output window, operand 1, single buffered']
    #allocation12 [shape = 's32[1]{0}', space=sflag, size = 0x4, scoped, tag = 'scoped memory for tpu_custom_call.1']
    #allocation13 [shape = 'u8[8192]{0}', space=vmem, size = 0x2000, scoped, tag = 'output window, operand 2, single buffered']
    #allocation14 [shape = 'u8[8192]{0}', space=vmem, size = 0x2000, scoped, tag = 'output window, operand 3, single buffered']
    #allocation15 [shape = 's32[1]{0}', space=sflag, size = 0x4, scoped, tag = 'scoped memory for tpu_custom_call.1']
    %13 = vsyncpa [#allocation3], 0
    %14 = vsyncpa [#allocation6], 0
    %15 = vsyncpa [#allocation9], 0
    %16 = vsyncpa [#allocation4], 0
    %17 = vsyncpa [#allocation12], 0
    %18 = vsyncpa [#allocation15], 0
    // Predicated region
    $region2: #{tpu_custom_call.1} parent=1 // pred_check
      _
    $region3: #{tpu_custom_call.1} parent=1 // pred_check_branch
      %20 = sbr.rel (0) target = $region5
    $region4: #{tpu_custom_call.1} parent=1 // pred_region
      %s22 = ssub.s32 256, 256
      %23 = vsyncadd [#allocation3], %s22
      %s24 = sshll.u32 [#allocation2], 4
      %s25 = int_to_ptr.vmem [resolvable:$true] %s24
      %30 = dma.hbm_to_vmem [thread:$0]  %s0, 256, %s25, [#allocation3], 128, 128, 8
    $region5: #{tpu_custom_call.1} parent=1 // pred_fallthru
      _
    // Predicated region
    $region6: #{tpu_custom_call.1} parent=1 // pred_check
      _
    $region7: #{tpu_custom_call.1} parent=1 // pred_check_branch
      %32 = sbr.rel (0) target = $region9
    $region8: #{tpu_custom_call.1} parent=1 // pred_region
      %s34 = ssub.s32 128, 128
      %35 = vsyncadd [#allocation6], %s34
      %s36 = sshll.u32 [#allocation5], 4
      %s37 = int_to_ptr.vmem [resolvable:$true] %s36
      %42 = dma.hbm_to_vmem [thread:$0]  %s1, 128, %s37, [#allocation6], 64, 64, 4
    $region9: #{tpu_custom_call.1} parent=1 // pred_fallthru
      _
    // Predicated region
    $region10: #{tpu_custom_call.1} parent=1 // pred_check
      _
    $region11: #{tpu_custom_call.1} parent=1 // pred_check_branch
      %44 = sbr.rel (0) target = $region13
    $region12: #{tpu_custom_call.1} parent=1 // pred_region
      %s46 = ssub.s32 2048, 2048
      %47 = vsyncadd [#allocation6], %s46
      %s48 = sshll.u32 [#allocation7], 4
      %s49 = int_to_ptr.vmem [resolvable:$true] %s48
      %54 = dma.hbm_to_vmem [thread:$0]  %s2, 2048, %s49, [#allocation6], 128, 128, 8
    $region13: #{tpu_custom_call.1} parent=1 // pred_fallthru
      _
    // Predicated region
    $region14: #{tpu_custom_call.1} parent=1 // pred_check
      _
    $region15: #{tpu_custom_call.1} parent=1 // pred_check_branch
      %56 = sbr.rel (0) target = $region17
    $region16: #{tpu_custom_call.1} parent=1 // pred_region
      %s58 = ssub.s32 2048, 2048
      %59 = vsyncadd [#allocation9], %s58
      %s60 = sshll.u32 [#allocation8], 4
      %s61 = int_to_ptr.vmem [resolvable:$true] %s60
      %66 = dma.hbm_to_vmem [thread:$0]  %s3, 2048, %s61, [#allocation9], 128, 128, 8
    $region17: #{tpu_custom_call.1} parent=1 // pred_fallthru
      _
    // Predicated region
    $region18: #{tpu_custom_call.1} parent=1 // pred_check
      _
    $region19: #{tpu_custom_call.1} parent=1 // pred_check_branch
      %68 = sbr.rel (0) target = $region21
    $region20: #{tpu_custom_call.1} parent=1 // pred_region
      %69 = dma.done [#allocation3], 256
    $region21: #{tpu_custom_call.1} parent=1 // pred_fallthru
      _
    // Predicated region
    $region22: #{tpu_custom_call.1} parent=1 // pred_check
      _
    $region23: #{tpu_custom_call.1} parent=1 // pred_check_branch
      %71 = sbr.rel (0) target = $region25
    $region24: #{tpu_custom_call.1} parent=1 // pred_region
      %72 = dma.done [#allocation6], 128
    $region25: #{tpu_custom_call.1} parent=1 // pred_fallthru
      _
    // Predicated region
    $region26: #{tpu_custom_call.1} parent=1 // pred_check
      _
    $region27: #{tpu_custom_call.1} parent=1 // pred_check_branch
      %74 = sbr.rel (0) target = $region29
    $region28: #{tpu_custom_call.1} parent=1 // pred_region
      %75 = dma.done [#allocation6], 2048
    $region29: #{tpu_custom_call.1} parent=1 // pred_fallthru
      _
    // Predicated region
    $region30: #{tpu_custom_call.1} parent=1 // pred_check
      _
    $region31: #{tpu_custom_call.1} parent=1 // pred_check_branch
      %77 = sbr.rel (0) target = $region33
    $region32: #{tpu_custom_call.1} parent=1 // pred_region
      %78 = dma.done [#allocation9], 2048
    $region33: #{tpu_custom_call.1} parent=1 // pred_fallthru
      _
    %v80 = vld [vmem:[#allocation2] sm:$0xff]
    %v81 = vld [vmem:[#allocation2 + $0x8] sm:$0xff]
    %v82 = vld [vmem:[#allocation7] sm:$0xff]
    %v83 = vld [vmem:[#allocation7 + $0x8] sm:$0xff]
    %v84 = vld [vmem:[#allocation7 + $0x10] sm:$0xff]
    %v85 = vld [vmem:[#allocation7 + $0x18] sm:$0xff]
    %v86 = vld [vmem:[#allocation7 + $0x20] sm:$0xff]
    %v87 = vld [vmem:[#allocation7 + $0x28] sm:$0xff]
    %v88 = vld [vmem:[#allocation7 + $0x30] sm:$0xff]
    %v89 = vld [vmem:[#allocation7 + $0x38] sm:$0xff]
    %v90 = vld [vmem:[#allocation7 + $0x40] sm:$0xff]
    %v91 = vld [vmem:[#allocation7 + $0x48] sm:$0xff]
    %v92 = vld [vmem:[#allocation7 + $0x50] sm:$0xff]
    %v93 = vld [vmem:[#allocation7 + $0x58] sm:$0xff]
    %v94 = vld [vmem:[#allocation7 + $0x60] sm:$0xff]
    %v95 = vld [vmem:[#allocation7 + $0x68] sm:$0xff]
    %v96 = vld [vmem:[#allocation7 + $0x70] sm:$0xff]
    %v97 = vld [vmem:[#allocation7 + $0x78] sm:$0xff]
    %98 = vmatprep.subr.mxu0 0.0
    %99 = vmatpush1.msra.mxu0 %v97
    %100 = vmatprep.subr.mxu0 0.0
    %101 = vmatpush1.msra.mxu0 %v96
    %102 = vmatprep.subr.mxu0 0.0
    %103 = vmatpush1.msra.mxu0 %v95
    %104 = vmatprep.subr.mxu0 0.0
    %105 = vmatpush1.msra.mxu0 %v94
    %106 = vmatprep.subr.mxu0 0.0
    %107 = vmatpush1.msra.mxu0 %v93
    %108 = vmatprep.subr.mxu0 0.0
    %109 = vmatpush1.msra.mxu0 %v92
    %110 = vmatprep.subr.mxu0 0.0
    %111 = vmatpush1.msra.mxu0 %v91
    %112 = vmatprep.subr.mxu0 0.0
    %113 = vmatpush1.msra.mxu0 %v90
    %114 = vmatprep.subr.mxu0 0.0
    %115 = vmatpush1.msra.mxu0 %v89
    %116 = vmatprep.subr.mxu0 0.0
    %117 = vmatpush1.msra.mxu0 %v88
    %118 = vmatprep.subr.mxu0 0.0
    %119 = vmatpush1.msra.mxu0 %v87
    %120 = vmatprep.subr.mxu0 0.0
    %121 = vmatpush1.msra.mxu0 %v86
    %122 = vmatprep.subr.mxu0 0.0
    %123 = vmatpush1.msra.mxu0 %v85
    %124 = vmatprep.subr.mxu0 0.0
    %125 = vmatpush1.msra.mxu0 %v84
    %126 = vmatprep.subr.mxu0 0.0
    %127 = vmatpush1.msra.mxu0 %v83
    %128 = vmatprep.subr.mxu0 0.0
    %129 = vmatpush1.msra.mxu0 %v82
    %130 = vmatprep.subr.mxu0 0.0
    %131 = vmatpush2.msra.mxu0 0.0
    %132 = vmatprep.subr.mxu0 0.0
    %133 = vmatpush2.msra.mxu0 0.0
    %134 = vmatprep.subr.mxu0 0.0
    %135 = vmatpush2.msra.mxu0 0.0
    %136 = vmatprep.subr.mxu0 0.0
    %137 = vmatpush2.msra.mxu0 0.0
    %138 = vmatprep.subr.mxu0 0.0
    %139 = vmatpush2.msra.mxu0 0.0
    %140 = vmatprep.subr.mxu0 0.0
    %141 = vmatpush2.msra.mxu0 0.0
    %142 = vmatprep.subr.mxu0 0.0
    %143 = vmatpush2.msra.mxu0 0.0
    %144 = vmatprep.subr.mxu0 0.0
    %145 = vmatpush2.msra.mxu0 0.0
    %146 = vmatprep.subr.mxu0 0.0
    %147 = vmatpush2.msra.mxu0 0.0
    %148 = vmatprep.subr.mxu0 0.0
    %149 = vmatpush2.msra.mxu0 0.0
    %150 = vmatprep.subr.mxu0 0.0
    %151 = vmatpush2.msra.mxu0 0.0
    %152 = vmatprep.subr.mxu0 0.0
    %153 = vmatpush2.msra.mxu0 0.0
    %154 = vmatprep.subr.mxu0 0.0
    %155 = vmatpush2.msra.mxu0 0.0
    %156 = vmatprep.subr.mxu0 0.0
    %157 = vmatpush2.msra.mxu0 0.0
    %158 = vmatprep.subr.mxu0 0.0
    %159 = vmatpush2.msra.mxu0 0.0
    %160 = vmatprep.subr.mxu0 0.0
    %161 = vmatpush2.msra.mxu0 0.0
    %162 = vmatprep.mubr.f32.mxu0 0.0
    %163 = vmatmul.mubr.f32.gmra.mxu0 %v80
    %v164 = vpop.f32.mrf.mxu0
    %v165 = vadd.f32 0.0, %v164
    %v166 = vpop.f32.mrf.mxu0
    %167 = vmatprep.mubr.f32.mxu0 0.0
    %168 = vmatmul.mubr.f32.gmra.mxu0 %v81
    %v169 = vpop.f32.mrf.mxu0
    %v170 = vadd.f32 0.0, %v169
    %v171 = vpop.f32.mrf.mxu0
    %172 = vdwg.mxu0
    %v173 = vld [vmem:[#allocation5] sm:$0xf]
    %v174 = vld [vmem:[#allocation5 + $0x4] sm:$0xf]
    %v175 = vpack.c.bf16 %v170, %v165
    %v178 = vunpack.c.l.b16 %v173
    %v179 = vunpack.c.l.b16 %v174
    %v180 = vpack.c.b16 %v179, %v178
    %vm181 = vcmask 130048
    %v183 = vsel %vm181, %v180, 0
    %185 = vmatprep.subr.bf16.mxu0 0
    %186 = vmatpush1.bf16.msra.mxu0 0
    %187 = vmatprep.subr.bf16.mxu0 0
    %188 = vmatpush1.bf16.msra.mxu0 0
    %189 = vmatprep.subr.bf16.mxu0 0
    %190 = vmatpush1.bf16.msra.mxu0 0
    %191 = vmatprep.subr.bf16.mxu0 0
    %192 = vmatpush1.bf16.msra.mxu0 0
    %193 = vmatprep.subr.bf16.mxu0 0
    %194 = vmatpush1.bf16.msra.mxu0 0
    %195 = vmatprep.subr.bf16.mxu0 0
    %196 = vmatpush1.bf16.msra.mxu0 0
    %197 = vmatprep.subr.bf16.mxu0 0
    %198 = vmatpush1.bf16.msra.mxu0 0
    %199 = vmatprep.subr.bf16.mxu0 0
    %200 = vmatpush1.bf16.msra.mxu0 %v175
    %201 = vmatprep.subr.bf16.mxu0 0
    %202 = vmatpush2.bf16.msra.mxu0 0
    %203 = vmatprep.subr.bf16.mxu0 0
    %204 = vmatpush2.bf16.msra.mxu0 0
    %205 = vmatprep.subr.bf16.mxu0 0
    %206 = vmatpush2.bf16.msra.mxu0 0
    %207 = vmatprep.subr.bf16.mxu0 0
    %208 = vmatpush2.bf16.msra.mxu0 0
    %209 = vmatprep.subr.bf16.mxu0 0
    %210 = vmatpush2.bf16.msra.mxu0 0
    %211 = vmatprep.subr.bf16.mxu0 0
    %212 = vmatpush2.bf16.msra.mxu0 0
    %213 = vmatprep.subr.bf16.mxu0 0
    %214 = vmatpush2.bf16.msra.mxu0 0
    %215 = vmatprep.subr.bf16.mxu0 0
    %216 = vmatpush2.bf16.msra.mxu0 0
    %217 = vmatprep.mubr.bf16.mxu0 0
    %218 = vmatmul.mubr.bf16.gmra.mxu0 %v183
    %v219 = vpop.f32.mrf.mxu0
    %v220 = vadd.f32 0.0, %v219
    %v221 = vpop.f32.mrf.mxu0
    %v222 = vpop.f32.mrf.mxu0
    %v223 = vadd.f32 0.0, %v222
    %v224 = vpop.f32.mrf.mxu0
    %225 = vdwg.mxu0
    %v226 = vmax.f32 %v220, 0.0
    %v227 = vmax.f32 %v223, 0.0
    %228 = vst [vmem:[#allocation10] sm:$0xff] %v226
    %229 = vst [vmem:[#allocation10 + $0x8] sm:$0xff] %v227
    %v230 = vpack.c.bf16 %v227, %v226
    %231 = vmatprep.subr.bf16.mxu0 0
    %232 = vmatpush1.bf16.msra.mxu0 0
    %233 = vmatprep.subr.bf16.mxu0 0
    %234 = vmatpush1.bf16.msra.mxu0 0
    %235 = vmatprep.subr.bf16.mxu0 0
    %236 = vmatpush1.bf16.msra.mxu0 0
    %237 = vmatprep.subr.bf16.mxu0 0
    %238 = vmatpush1.bf16.msra.mxu0 0
    %239 = vmatprep.subr.bf16.mxu0 0
    %240 = vmatpush1.bf16.msra.mxu0 0
    %241 = vmatprep.subr.bf16.mxu0 0
    %242 = vmatpush1.bf16.msra.mxu0 0
    %243 = vmatprep.subr.bf16.mxu0 0
    %244 = vmatpush1.bf16.msra.mxu0 0
    %245 = vmatprep.subr.bf16.mxu0 0
    %246 = vmatpush1.bf16.msra.mxu0 %v230
    %247 = vmatprep.subr.bf16.mxu0 0
    %248 = vmatpush2.bf16.msra.mxu0 0
    %249 = vmatprep.subr.bf16.mxu0 0
    %250 = vmatpush2.bf16.msra.mxu0 0
    %251 = vmatprep.subr.bf16.mxu0 0
    %252 = vmatpush2.bf16.msra.mxu0 0
    %253 = vmatprep.subr.bf16.mxu0 0
    %254 = vmatpush2.bf16.msra.mxu0 0
    %255 = vmatprep.subr.bf16.mxu0 0
    %256 = vmatpush2.bf16.msra.mxu0 0
    %257 = vmatprep.subr.bf16.mxu0 0
    %258 = vmatpush2.bf16.msra.mxu0 0
    %259 = vmatprep.subr.bf16.mxu0 0
    %260 = vmatpush2.bf16.msra.mxu0 0
    %261 = vmatprep.subr.bf16.mxu0 0
    %262 = vmatpush2.bf16.msra.mxu0 0
    %263 = vmatprep.mubr.bf16.mxu0 0
    %264 = vmatmul.mubr.bf16.gmra.mxu0 %v183
    %v265 = vpop.f32.mrf.mxu0
    %v266 = vadd.f32 0.0, %v265
    %v267 = vpop.f32.mrf.mxu0
    %v268 = vpop.f32.mrf.mxu0
    %v269 = vadd.f32 0.0, %v268
    %v270 = vpop.f32.mrf.mxu0
    %271 = vdwg.mxu0
    %272 = vst [vmem:[#allocation11] sm:$0xff] %v266
    %273 = vst [vmem:[#allocation11 + $0x8] sm:$0xff] %v269
    %v274 = vld [vmem:[#allocation8] sm:$0xff]
    %v275 = vld [vmem:[#allocation8 + $0x8] sm:$0xff]
    %v276 = vld [vmem:[#allocation8 + $0x10] sm:$0xff]
    %v277 = vld [vmem:[#allocation8 + $0x18] sm:$0xff]
    %v278 = vld [vmem:[#allocation8 + $0x20] sm:$0xff]
    %v279 = vld [vmem:[#allocation8 + $0x28] sm:$0xff]
    %v280 = vld [vmem:[#allocation8 + $0x30] sm:$0xff]
    %v281 = vld [vmem:[#allocation8 + $0x38] sm:$0xff]
    %v282 = vld [vmem:[#allocation8 + $0x40] sm:$0xff]
    %v283 = vld [vmem:[#allocation8 + $0x48] sm:$0xff]
    %v284 = vld [vmem:[#allocation8 + $0x50] sm:$0xff]
    %v285 = vld [vmem:[#allocation8 + $0x58] sm:$0xff]
    %v286 = vld [vmem:[#allocation8 + $0x60] sm:$0xff]
    %v287 = vld [vmem:[#allocation8 + $0x68] sm:$0xff]
    %v288 = vld [vmem:[#allocation8 + $0x70] sm:$0xff]
    %v289 = vld [vmem:[#allocation8 + $0x78] sm:$0xff]
    %290 = vmatprep.subr.mxu0 0.0
    %291 = vmatpush1.msra.mxu0 %v289
    %292 = vmatprep.subr.mxu0 0.0
    %293 = vmatpush1.msra.mxu0 %v288
    %294 = vmatprep.subr.mxu0 0.0
    %295 = vmatpush1.msra.mxu0 %v287
    %296 = vmatprep.subr.mxu0 0.0
    %297 = vmatpush1.msra.mxu0 %v286
    %298 = vmatprep.subr.mxu0 0.0
    %299 = vmatpush1.msra.mxu0 %v285
    %300 = vmatprep.subr.mxu0 0.0
    %301 = vmatpush1.msra.mxu0 %v284
    %302 = vmatprep.subr.mxu0 0.0
    %303 = vmatpush1.msra.mxu0 %v283
    %304 = vmatprep.subr.mxu0 0.0
    %305 = vmatpush1.msra.mxu0 %v282
    %306 = vmatprep.subr.mxu0 0.0
    %307 = vmatpush1.msra.mxu0 %v281
    %308 = vmatprep.subr.mxu0 0.0
    %309 = vmatpush1.msra.mxu0 %v280
    %310 = vmatprep.subr.mxu0 0.0
    %311 = vmatpush1.msra.mxu0 %v279
    %312 = vmatprep.subr.mxu0 0.0
    %313 = vmatpush1.msra.mxu0 %v278
    %314 = vmatprep.subr.mxu0 0.0
    %315 = vmatpush1.msra.mxu0 %v277
    %316 = vmatprep.subr.mxu0 0.0
    %317 = vmatpush1.msra.mxu0 %v276
    %318 = vmatprep.subr.mxu0 0.0
    %319 = vmatpush1.msra.mxu0 %v275
    %320 = vmatprep.subr.mxu0 0.0
    %321 = vmatpush1.msra.mxu0 %v274
    %322 = vmatprep.subr.mxu0 0.0
    %323 = vmatpush2.msra.mxu0 0.0
    %324 = vmatprep.subr.mxu0 0.0
    %325 = vmatpush2.msra.mxu0 0.0
    %326 = vmatprep.subr.mxu0 0.0
    %327 = vmatpush2.msra.mxu0 0.0
    %328 = vmatprep.subr.mxu0 0.0
    %329 = vmatpush2.msra.mxu0 0.0
    %330 = vmatprep.subr.mxu0 0.0
    %331 = vmatpush2.msra.mxu0 0.0
    %332 = vmatprep.subr.mxu0 0.0
    %333 = vmatpush2.msra.mxu0 0.0
    %334 = vmatprep.subr.mxu0 0.0
    %335 = vmatpush2.msra.mxu0 0.0
    %336 = vmatprep.subr.mxu0 0.0
    %337 = vmatpush2.msra.mxu0 0.0
    %338 = vmatprep.subr.mxu0 0.0
    %339 = vmatpush2.msra.mxu0 0.0
    %340 = vmatprep.subr.mxu0 0.0
    %341 = vmatpush2.msra.mxu0 0.0
    %342 = vmatprep.subr.mxu0 0.0
    %343 = vmatpush2.msra.mxu0 0.0
    %344 = vmatprep.subr.mxu0 0.0
    %345 = vmatpush2.msra.mxu0 0.0
    %346 = vmatprep.subr.mxu0 0.0
    %347 = vmatpush2.msra.mxu0 0.0
    %348 = vmatprep.subr.mxu0 0.0
    %349 = vmatpush2.msra.mxu0 0.0
    %350 = vmatprep.subr.mxu0 0.0
    %351 = vmatpush2.msra.mxu0 0.0
    %352 = vmatprep.subr.mxu0 0.0
    %353 = vmatpush2.msra.mxu0 0.0
    %354 = vmatprep.mubr.f32.mxu0 0.0
    %355 = vmatmul.mubr.f32.gmra.mxu0 %v266
    %v356 = vpop.f32.mrf.mxu0
    %v357 = vadd.f32 0.0, %v356
    %v358 = vpop.f32.mrf.mxu0
    %359 = vmatprep.mubr.f32.mxu0 0.0
    %360 = vmatmul.mubr.f32.gmra.mxu0 %v269
    %v361 = vpop.f32.mrf.mxu0
    %v362 = vadd.f32 0.0, %v361
    %v363 = vpop.f32.mrf.mxu0
    %364 = vdwg.mxu0
    %365 = vst [vmem:[#allocation13] sm:$0xff] %v357
    %366 = vst [vmem:[#allocation13 + $0x8] sm:$0xff] %v362
    %v367 = vlaneseq
    %v368 = vand.u32 %v367, 127
    %vm369 = vcmp.lt.s32.totalorder %v368, 4
    %v370 = vsel %vm369, %v357, -1e+30
    %v371 = vsel %vm369, %v362, -1e+30
    %372 = vmax.xlane.f32.xlu0 %v370
    %v373 = vpop.xlane.xlu0 %372
    %374 = vmax.xlane.f32.xlu0 %v371
    %v375 = vpop.xlane.xlu0 %374
    %v376 = vsub.f32 %v370, %v373
    %v377 = vsub.f32 %v371, %v375
    %v378 = vmul.f32 %v376, 1.442695
    %v379 = vpow.pop %v378
    %v380 = vmul.f32 %v377, 1.442695
    %v381 = vpow.pop %v380
    %382 = vadd.xlane.f32.xlu0 %v379
    %v383 = vpop.xlane.xlu0 %382
    %384 = vadd.xlane.f32.xlu0 %v381
    %v385 = vpop.xlane.xlu0 %384
    %v386 = vlog2.pop %v383
    %v387 = vmul.f32 %v386, 0.6931472
    %v388 = vlog2.pop %v385
    %v389 = vmul.f32 %v388, 0.6931472
    %v390 = vsub.f32 %v376, %v387
    %v391 = vsub.f32 %v377, %v389
    %392 = vst [vmem:[#allocation14] sm:$0xff] %v390
    %393 = vst [vmem:[#allocation14 + $0x8] sm:$0xff] %v391
    // Predicated region
    $region34: #{tpu_custom_call.1} parent=1 // pred_check
      _
    $region35: #{tpu_custom_call.1} parent=1 // pred_check_branch
      %395 = sbr.rel (0) target = $region37
    $region36: #{tpu_custom_call.1} parent=1 // pred_region
      %s397 = ssub.s32 256, 256
      %398 = vsyncadd [#allocation4], %s397
      %s399 = sshll.u32 [#allocation10], 4
      %s400 = int_to_ptr.vmem [resolvable:$true] %s399
      %405 = dma.vmem_to_hbm [thread:$0]  %s400, 256, %s4, [#allocation4], 128, 128, 8
    $region37: #{tpu_custom_call.1} parent=1 // pred_fallthru
      _
    // Predicated region
    $region38: #{tpu_custom_call.1} parent=1 // pred_check
      _
    $region39: #{tpu_custom_call.1} parent=1 // pred_check_branch
      %407 = sbr.rel (0) target = $region41
    $region40: #{tpu_custom_call.1} parent=1 // pred_region
      %s409 = ssub.s32 256, 256
      %410 = vsyncadd [#allocation12], %s409
      %s411 = sshll.u32 [#allocation11], 4
      %s412 = int_to_ptr.vmem [resolvable:$true] %s411
      %417 = dma.vmem_to_hbm [thread:$0]  %s412, 256, %s5, [#allocation12], 128, 128, 8
    $region41: #{tpu_custom_call.1} parent=1 // pred_fallthru
      _
    // Predicated region
    $region42: #{tpu_custom_call.1} parent=1 // pred_check
      _
    $region43: #{tpu_custom_call.1} parent=1 // pred_check_branch
      %419 = sbr.rel (0) target = $region45
    $region44: #{tpu_custom_call.1} parent=1 // pred_region
      %s421 = ssub.s32 256, 256
      %422 = vsyncadd [#allocation12], %s421
      %s423 = sshll.u32 [#allocation13], 4
      %s424 = int_to_ptr.vmem [resolvable:$true] %s423
      %429 = dma.vmem_to_hbm [thread:$0]  %s424, 256, %s6, [#allocation12], 128, 128, 8
    $region45: #{tpu_custom_call.1} parent=1 // pred_fallthru
      _
    // Predicated region
    $region46: #{tpu_custom_call.1} parent=1 // pred_check
      _
    $region47: #{tpu_custom_call.1} parent=1 // pred_check_branch
      %431 = sbr.rel (0) target = $region49
    $region48: #{tpu_custom_call.1} parent=1 // pred_region
      %s433 = ssub.s32 256, 256
      %434 = vsyncadd [#allocation15], %s433
      %s435 = sshll.u32 [#allocation14], 4
      %s436 = int_to_ptr.vmem [resolvable:$true] %s435
      %441 = dma.vmem_to_hbm [thread:$0]  %s436, 256, %s7, [#allocation15], 128, 128, 8
    $region49: #{tpu_custom_call.1} parent=1 // pred_fallthru
      _
    // Predicated region
    $region50: #{tpu_custom_call.1} parent=1 // pred_check
      _
    $region51: #{tpu_custom_call.1} parent=1 // pred_check_branch
      %443 = sbr.rel (0) target = $region53
    $region52: #{tpu_custom_call.1} parent=1 // pred_region
      %444 = dma.done [#allocation4], 256
    $region53: #{tpu_custom_call.1} parent=1 // pred_fallthru
      _
    // Predicated region
    $region54: #{tpu_custom_call.1} parent=1 // pred_check
      _
    $region55: #{tpu_custom_call.1} parent=1 // pred_check_branch
      %446 = sbr.rel (0) target = $region57
    $region56: #{tpu_custom_call.1} parent=1 // pred_region
      %447 = dma.done [#allocation12], 256
    $region57: #{tpu_custom_call.1} parent=1 // pred_fallthru
      _
    // Predicated region
    $region58: #{tpu_custom_call.1} parent=1 // pred_check
      _
    $region59: #{tpu_custom_call.1} parent=1 // pred_check_branch
      %449 = sbr.rel (0) target = $region61
    $region60: #{tpu_custom_call.1} parent=1 // pred_region
      %450 = dma.done [#allocation12], 256
    $region61: #{tpu_custom_call.1} parent=1 // pred_fallthru
      _
    // Predicated region
    $region62: #{tpu_custom_call.1} parent=1 // pred_check
      _
    $region63: #{tpu_custom_call.1} parent=1 // pred_check_branch
      %452 = sbr.rel (0) target = $region65
    $region64: #{tpu_custom_call.1} parent=1 // pred_region
      %453 = dma.done [#allocation15], 256
    $region65: #{tpu_custom_call.1} parent=1 // pred_fallthru
      _
    %454 = vsyncpa [#allocation3], 1
    %455 = vsyncpa [#allocation6], 1
    %456 = vsyncpa [#allocation9], 1
    %457 = vsyncpa [#allocation4], 1
    %458 = vsyncpa [#allocation12], 1
    %459 = vsyncpa [#allocation15], 1

</llo_original>
